<compile_context>
chip_gen: v6e
topology: v6e:2x2x1
jax: 0.10.0
libtpu: 0.0.40
codegen_flags: <defaults>
</compile_context>

<pallas_src>
import functools

import jax
import jax.numpy as jnp
from jax.experimental import pallas as pl
from jax.experimental.pallas import tpu as pltpu


def _round_up(x, m):
    return (x + m - 1) // m * m


def _const_index_map(ndim):
    def im(i):
        return (0,) * ndim
    return im


def _fused_kernel(x_ref, *refs, ks, lp, l_out):
    """One batch tile, all stages fused, channels-on-sublanes layout.

    x_ref : (bn, C, L)                 raw NCL input tile (compact, no padding)
    refs  : per stage: w1T (ks, H, Cin), b1 (H, 1), w2T (H, H), b2 (H, 1)
            followed by o_ref : (bn, H_last, l_out)
    """
    o_ref = refs[-1]
    w_refs = refs[:-1]
    num_stages = len(w_refs) // 4

    bn, c_in, l_in = x_ref.shape
    f32 = jnp.float32

    # ---- assemble (C, bn*Lp): channels on sublanes, flat (batch, position) on lanes ----
    pieces = []
    for b in range(bn):
        xb = x_ref[b].astype(f32)                                        # (C, L)
        if lp > l_in:
            xb = jnp.concatenate([xb, jnp.zeros((c_in, lp - l_in), f32)], axis=1)
        pieces.append(xb)
    cur = pieces[0] if bn == 1 else jnp.concatenate(pieces, axis=1)      # (C, bn*Lp)

    # ---- stages: ks-tap conv -> tanh -> 1x1 conv -> tanh, all on the MXU ----
    for s in range(num_stages):
        w1_ref = w_refs[4 * s + 0]           # (ks, H, Cin) ref
        b1 = w_refs[4 * s + 1][...]          # (H, 1)
        w2 = w_refs[4 * s + 2][...]          # (H, H)
        b2 = w_refs[4 * s + 3][...]          # (H, 1)
        c = cur.shape[0]
        m = cur.shape[1]

        acc = None
        for t in range(ks):                  # sum-of-taps: no im2col copy
            if t == 0:
                tap = cur
            else:
                tap = jnp.concatenate(
                    [cur[:, t:], jnp.zeros((c, t), f32)], axis=1)        # (C, bn*Lp)
            contrib = jnp.dot(w1_ref[t], tap, preferred_element_type=f32)  # (H, bn*Lp)
            acc = contrib if acc is None else acc + contrib
        h = jnp.tanh(acc + b1)
        cur = jnp.tanh(jnp.dot(w2, h, preferred_element_type=f32) + b2)  # (H, bn*Lp)
        del m

    # ---- store only the valid columns of each batch element: (H_last, l_out) slabs ----
    for b in range(bn):
        o_ref[b] = cur[:, b * lp:b * lp + l_out].astype(o_ref.dtype)


def conv1d_block_forward(x_ncl, params, ks):
    """Full Conv1dBlock forward. x_ncl: (N, C, L) like PyTorch. Returns (N, H_last, L_out)."""
    n, c_in, l = x_ncl.shape
    num_stages = len(params)
    l_out = l - num_stages * (ks - 1)
    assert l_out > 0, "sequence too short for this many conv stages"
    lp = _round_up(l, 8)   # constant per-batch stride; keeps every shape 8-sublane aligned

    # ---- pack weights transposed (W^T @ act form), biases as (H, 1) columns ----
    flat_w = []
    w_bytes = 0
    max_c = c_in
    for (w1_pt, b1, w2_pt, b2) in params:
        nh = w1_pt.shape[0]
        w1t = jnp.transpose(w1_pt, (2, 0, 1)).astype(jnp.float32)        # (ks, nh, last)
        b1c = b1.reshape(nh, 1).astype(jnp.float32)
        w2t = w2_pt[:, :, 0].astype(jnp.float32)                         # (nh, nh)
        b2c = b2.reshape(nh, 1).astype(jnp.float32)
        flat_w += [w1t, b1c, w2t, b2c]
        w_bytes += 4 * (w1t.size + b1c.size + w2t.size + b2c.size)
        max_c = max(max_c, nh)
    h_last = params[-1][0].shape[0]

    # ---- VMEM-budget-driven batch tile ----
    try:
        vmem_cap = int(pltpu.get_tpu_info().vmem_capacity_bytes)
    except Exception:                       # conservative fallback (v7x-sized VMEM)
        vmem_cap = 64 * 1024 * 1024
    budget = int(0.55 * vmem_cap)           # per-grid-step working-set budget
    vmem_limit = int(0.80 * vmem_cap)

    def est(bn):
        # double-buffered in/out tiles + (double-buffered) weights + live activation values
        m = bn * lp
        return (2 * bn * c_in * l * 4
                + 2 * bn * h_last * l_out * 4
                + 2 * w_bytes
                + 6 * max_c * m * 4)

    divs = [d for d in range(1, n + 1) if n % d == 0]
    fitting = [d for d in divs if est(d) <= budget] or [1]
    # keep the grid length >= 2 so v7x can shard the parallel axis over both TensorCores
    grid_ok = [d for d in fitting if n // d >= 2] or fitting
    tall = [d for d in grid_ok if d * lp >= 512]     # matmul minor dim >= 512 (mult. of 8)
    bn = min(tall) if tall else max(grid_ok)
    grid = (n // bn,)

    in_specs = [pl.BlockSpec((bn, c_in, l), lambda i: (i, 0, 0))]
    for w in flat_w:
        in_specs.append(pl.BlockSpec(w.shape, _const_index_map(w.ndim)))
    out_spec = pl.BlockSpec((bn, h_last, l_out), lambda i: (i, 0, 0))

    kernel = functools.partial(_fused_kernel, ks=ks, lp=lp, l_out=l_out)
    return pl.pallas_call(
        kernel,
        out_shape=jax.ShapeDtypeStruct((n, h_last, l_out), jnp.float32),
        grid=grid,
        in_specs=in_specs,
        out_specs=out_spec,
        compiler_params=pltpu.CompilerParams(
            dimension_semantics=("parallel",),
            vmem_limit_bytes=vmem_limit),
    )(x_ncl.astype(jnp.float32), *flat_w)


def init_conv1d_block_params(key, input_dim, hidden_dims, ks):
    """Deterministic synthetic parameters matching nn.Conv1d shapes:
    for each nh: Conv1d(last, nh, ks) -> weight (nh, last, ks), bias (nh,)
                 Conv1d(nh, nh, 1)    -> weight (nh, nh, 1),    bias (nh,)
    """
    params = []
    last = input_dim
    for nh in hidden_dims:
        key, k1, k2, k3, k4 = jax.random.split(key, 5)
        w1_pt = jax.random.normal(k1, (nh, last, ks), jnp.float32) * 0.1
        b1 = jax.random.normal(k2, (nh,), jnp.float32) * 0.1
        w2_pt = jax.random.normal(k3, (nh, nh, 1), jnp.float32) * 0.1
        b2 = jax.random.normal(k4, (nh,), jnp.float32) * 0.1
        params.append((w1_pt, b1, w2_pt, b2))
        last = nh
    return params


def _reference_forward(x_ncl, params, ks):
    """Pure-jnp reference replicating PyTorch Conv1d (valid conv, stride 1) + tanh."""
    x = x_ncl
    for (w1_pt, b1, w2_pt, b2) in params:
        for (w_pt, b) in ((w1_pt, b1), (w2_pt, b2)):
            ksz = w_pt.shape[-1]
            lout = x.shape[-1] - ksz + 1
            y = jnp.zeros((x.shape[0], w_pt.shape[0], lout), jnp.float32)
            for t in range(ksz):
                y = y + jnp.einsum('ncl,oc->nol', x[:, :, t:t + lout], w_pt[:, :, t])
            x = jnp.tanh(y + b[None, :, None])
    return x


if __name__ == "__main__":
    # Small shapes consistent with the module: batch=2, input_dim=4 channels, L=16,
    # hidden_dims=[32, 32] (two fused stages), ks=2, activation='tanh'.
    N, C_IN, L = 2, 4, 16
    HIDDEN_DIMS = [32, 32]
    KS = 2

    key = jax.random.PRNGKey(0)
    key, kx = jax.random.split(key)
    x = jax.random.normal(kx, (N, C_IN, L), jnp.float32)   # PyTorch NCL layout

    params = init_conv1d_block_params(key, C_IN, HIDDEN_DIMS, KS)

    out = conv1d_block_forward(x, params, KS)
    out = jax.block_until_ready(out)

    ref = _reference_forward(x, params, KS)
    l_out = L - len(HIDDEN_DIMS) * (KS - 1)
    assert out.shape == (N, HIDDEN_DIMS[-1], l_out), out.shape
    assert jnp.allclose(out, ref, atol=1e-5, rtol=1e-5), float(jnp.max(jnp.abs(out - ref)))

    print("KERNEL_OK")
</pallas_src>

<mosaic_0001>
module attributes {stable_mosaic.version = 11 : i64} {
  func.func @_fused_kernel(%arg0: i32, %arg1: memref<1x4x16xf32, #tpu.memory_space<vmem>>, %arg2: memref<2x32x4xf32, #tpu.memory_space<vmem>>, %arg3: memref<32x1xf32, #tpu.memory_space<vmem>>, %arg4: memref<32x32xf32, #tpu.memory_space<vmem>>, %arg5: memref<32x1xf32, #tpu.memory_space<vmem>>, %arg6: memref<2x32x32xf32, #tpu.memory_space<vmem>>, %arg7: memref<32x1xf32, #tpu.memory_space<vmem>>, %arg8: memref<32x32xf32, #tpu.memory_space<vmem>>, %arg9: memref<32x1xf32, #tpu.memory_space<vmem>>, %arg10: memref<1x32x14xf32, #tpu.memory_space<vmem>>) attributes {dimension_semantics = [#tpu.dimension_semantics<parallel>], iteration_bounds = array<i64: 2>, scalar_prefetch = 0 : i64, scratch_operands = 0 : i64, tpu.core_type = #tpu.core_type<tc>, window_params = [{transform_indices = @transform_0, window_bounds = array<i64: 1, 4, 16>}, {pipeline_mode = #tpu.pipeline_mode<synchronous>, transform_indices = @transform_1, window_bounds = array<i64: 2, 32, 4>}, {pipeline_mode = #tpu.pipeline_mode<synchronous>, transform_indices = @transform_2, window_bounds = array<i64: 32, 1>}, {pipeline_mode = #tpu.pipeline_mode<synchronous>, transform_indices = @transform_3, window_bounds = array<i64: 32, 32>}, {pipeline_mode = #tpu.pipeline_mode<synchronous>, transform_indices = @transform_4, window_bounds = array<i64: 32, 1>}, {pipeline_mode = #tpu.pipeline_mode<synchronous>, transform_indices = @transform_5, window_bounds = array<i64: 2, 32, 32>}, {pipeline_mode = #tpu.pipeline_mode<synchronous>, transform_indices = @transform_6, window_bounds = array<i64: 32, 1>}, {pipeline_mode = #tpu.pipeline_mode<synchronous>, transform_indices = @transform_7, window_bounds = array<i64: 32, 32>}, {pipeline_mode = #tpu.pipeline_mode<synchronous>, transform_indices = @transform_8, window_bounds = array<i64: 32, 1>}, {transform_indices = @transform_9, window_bounds = array<i64: 1, 32, 14>}]} {
    %c0 = arith.constant 0 : index
    %c0_0 = arith.constant 0 : index
    %c0_1 = arith.constant 0 : index
    %0 = vector.load %arg1[%c0, %c0_0, %c0_1] : memref<1x4x16xf32, #tpu.memory_space<vmem>>, vector<1x4x16xf32>
    %1 = vector.shape_cast %0 : vector<1x4x16xf32> to vector<4x16xf32>
    %c0_2 = arith.constant 0 : index
    %c0_3 = arith.constant 0 : index
    %2 = vector.load %arg3[%c0_2, %c0_3] : memref<32x1xf32, #tpu.memory_space<vmem>>, vector<32x1xf32>
    %c0_4 = arith.constant 0 : index
    %c0_5 = arith.constant 0 : index
    %3 = vector.load %arg4[%c0_4, %c0_5] : memref<32x32xf32, #tpu.memory_space<vmem>>, vector<32x32xf32>
    %c0_6 = arith.constant 0 : index
    %c0_7 = arith.constant 0 : index
    %4 = vector.load %arg5[%c0_6, %c0_7] : memref<32x1xf32, #tpu.memory_space<vmem>>, vector<32x1xf32>
    %c0_8 = arith.constant 0 : index
    %c0_9 = arith.constant 0 : index
    %c0_10 = arith.constant 0 : index
    %5 = vector.load %arg2[%c0_8, %c0_9, %c0_10] : memref<2x32x4xf32, #tpu.memory_space<vmem>>, vector<1x32x4xf32>
    %6 = vector.shape_cast %5 : vector<1x32x4xf32> to vector<32x4xf32>
    %cst = arith.constant dense<0.000000e+00> : vector<32x16xf32>
    %7 = tpu.matmul %6, %1, %cst {dimension_numbers = #tpu.dot_dimension_numbers<[1], [0], [0], [1], [0, 0, 1, 1], [], []>} : vector<32x4xf32>, vector<4x16xf32>, vector<32x16xf32> -> vector<32x16xf32>
    %8 = vector.extract_strided_slice %1 {offsets = [0, 1], sizes = [4, 15], strides = [1, 1]} : vector<4x16xf32> to vector<4x15xf32>
    %cst_11 = arith.constant 0.000000e+00 : f32
    %9 = vector.broadcast %cst_11 : f32 to vector<4x1xf32>
    %10 = tpu.concatenate %8, %9 in 1 : vector<4x15xf32>, vector<4x1xf32> -> vector<4x16xf32>
    %c1 = arith.constant 1 : index
    %c0_12 = arith.constant 0 : index
    %c0_13 = arith.constant 0 : index
    %11 = vector.load %arg2[%c1, %c0_12, %c0_13] : memref<2x32x4xf32, #tpu.memory_space<vmem>>, vector<1x32x4xf32>
    %12 = vector.shape_cast %11 : vector<1x32x4xf32> to vector<32x4xf32>
    %cst_14 = arith.constant dense<0.000000e+00> : vector<32x16xf32>
    %13 = tpu.matmul %12, %10, %cst_14 {dimension_numbers = #tpu.dot_dimension_numbers<[1], [0], [0], [1], [0, 0, 1, 1], [], []>} : vector<32x4xf32>, vector<4x16xf32>, vector<32x16xf32> -> vector<32x16xf32>
    %14 = arith.addf %7, %13 : vector<32x16xf32>
    %15 = vector.broadcast %2 : vector<32x1xf32> to vector<32x16xf32>
    %16 = arith.addf %14, %15 : vector<32x16xf32>
    %17 = math.tanh %16 : vector<32x16xf32>
    %cst_15 = arith.constant dense<0.000000e+00> : vector<32x16xf32>
    %18 = tpu.matmul %3, %17, %cst_15 {dimension_numbers = #tpu.dot_dimension_numbers<[1], [0], [0], [1], [0, 0, 1, 1], [], []>} : vector<32x32xf32>, vector<32x16xf32>, vector<32x16xf32> -> vector<32x16xf32>
    %19 = vector.broadcast %4 : vector<32x1xf32> to vector<32x16xf32>
    %20 = arith.addf %18, %19 : vector<32x16xf32>
    %21 = math.tanh %20 : vector<32x16xf32>
    %c0_16 = arith.constant 0 : index
    %c0_17 = arith.constant 0 : index
    %22 = vector.load %arg7[%c0_16, %c0_17] : memref<32x1xf32, #tpu.memory_space<vmem>>, vector<32x1xf32>
    %c0_18 = arith.constant 0 : index
    %c0_19 = arith.constant 0 : index
    %23 = vector.load %arg8[%c0_18, %c0_19] : memref<32x32xf32, #tpu.memory_space<vmem>>, vector<32x32xf32>
    %c0_20 = arith.constant 0 : index
    %c0_21 = arith.constant 0 : index
    %24 = vector.load %arg9[%c0_20, %c0_21] : memref<32x1xf32, #tpu.memory_space<vmem>>, vector<32x1xf32>
    %c0_22 = arith.constant 0 : index
    %c0_23 = arith.constant 0 : index
    %c0_24 = arith.constant 0 : index
    %25 = vector.load %arg6[%c0_22, %c0_23, %c0_24] : memref<2x32x32xf32, #tpu.memory_space<vmem>>, vector<1x32x32xf32>
    %26 = vector.shape_cast %25 : vector<1x32x32xf32> to vector<32x32xf32>
    %cst_25 = arith.constant dense<0.000000e+00> : vector<32x16xf32>
    %27 = tpu.matmul %26, %21, %cst_25 {dimension_numbers = #tpu.dot_dimension_numbers<[1], [0], [0], [1], [0, 0, 1, 1], [], []>} : vector<32x32xf32>, vector<32x16xf32>, vector<32x16xf32> -> vector<32x16xf32>
    %28 = vector.extract_strided_slice %21 {offsets = [0, 1], sizes = [32, 15], strides = [1, 1]} : vector<32x16xf32> to vector<32x15xf32>
    %cst_26 = arith.constant 0.000000e+00 : f32
    %29 = vector.broadcast %cst_26 : f32 to vector<32x1xf32>
    %30 = tpu.concatenate %28, %29 in 1 : vector<32x15xf32>, vector<32x1xf32> -> vector<32x16xf32>
    %c1_27 = arith.constant 1 : index
    %c0_28 = arith.constant 0 : index
    %c0_29 = arith.constant 0 : index
    %31 = vector.load %arg6[%c1_27, %c0_28, %c0_29] : memref<2x32x32xf32, #tpu.memory_space<vmem>>, vector<1x32x32xf32>
    %32 = vector.shape_cast %31 : vector<1x32x32xf32> to vector<32x32xf32>
    %cst_30 = arith.constant dense<0.000000e+00> : vector<32x16xf32>
    %33 = tpu.matmul %32, %30, %cst_30 {dimension_numbers = #tpu.dot_dimension_numbers<[1], [0], [0], [1], [0, 0, 1, 1], [], []>} : vector<32x32xf32>, vector<32x16xf32>, vector<32x16xf32> -> vector<32x16xf32>
    %34 = arith.addf %27, %33 : vector<32x16xf32>
    %35 = vector.broadcast %22 : vector<32x1xf32> to vector<32x16xf32>
    %36 = arith.addf %34, %35 : vector<32x16xf32>
    %37 = math.tanh %36 : vector<32x16xf32>
    %cst_31 = arith.constant dense<0.000000e+00> : vector<32x16xf32>
    %38 = tpu.matmul %23, %37, %cst_31 {dimension_numbers = #tpu.dot_dimension_numbers<[1], [0], [0], [1], [0, 0, 1, 1], [], []>} : vector<32x32xf32>, vector<32x16xf32>, vector<32x16xf32> -> vector<32x16xf32>
    %39 = vector.broadcast %24 : vector<32x1xf32> to vector<32x16xf32>
    %40 = arith.addf %38, %39 : vector<32x16xf32>
    %41 = math.tanh %40 : vector<32x16xf32>
    %42 = vector.extract_strided_slice %41 {offsets = [0, 0], sizes = [32, 14], strides = [1, 1]} : vector<32x16xf32> to vector<32x14xf32>
    %c0_32 = arith.constant 0 : index
    %c0_33 = arith.constant 0 : index
    %c0_34 = arith.constant 0 : index
    %43 = vector.load %arg10[%c0_32, %c0_33, %c0_34] : memref<1x32x14xf32, #tpu.memory_space<vmem>>, vector<1x32x14xf32>
    %44 = vector.shape_cast %43 : vector<1x32x14xf32> to vector<32x14xf32>
    %45 = vector.shape_cast %42 : vector<32x14xf32> to vector<1x32x14xf32>
    tpu.vector_store %arg10[%c0_32, %c0_33, %c0_34], %45 {strides = array<i32>} : memref<1x32x14xf32, #tpu.memory_space<vmem>>, vector<1x32x14xf32>,
    return
  }
  func.func @transform_0(%arg0: i32) -> (i32, i32, i32) {
    %c0_i32 = arith.constant 0 : i32
    %c0_i32_0 = arith.constant 0 : i32
    %c0_i32_1 = arith.constant 0 : i32
    return %arg0, %c0_i32, %c0_i32_0 : i32, i32, i32
  }
  func.func @transform_1(%arg0: i32) -> (i32, i32, i32) {
    %c0_i32 = arith.constant 0 : i32
    %c0_i32_0 = arith.constant 0 : i32
    %c0_i32_1 = arith.constant 0 : i32
    %c0_i32_2 = arith.constant 0 : i32
    return %c0_i32, %c0_i32_0, %c0_i32_1 : i32, i32, i32
  }
  func.func @transform_2(%arg0: i32) -> (i32, i32) {
    %c0_i32 = arith.constant 0 : i32
    %c0_i32_0 = arith.constant 0 : i32
    %c0_i32_1 = arith.constant 0 : i32
    return %c0_i32, %c0_i32_0 : i32, i32
  }
  func.func @transform_3(%arg0: i32) -> (i32, i32) {
    %c0_i32 = arith.constant 0 : i32
    %c0_i32_0 = arith.constant 0 : i32
    %c0_i32_1 = arith.constant 0 : i32
    return %c0_i32, %c0_i32_0 : i32, i32
  }
  func.func @transform_4(%arg0: i32) -> (i32, i32) {
    %c0_i32 = arith.constant 0 : i32
    %c0_i32_0 = arith.constant 0 : i32
    %c0_i32_1 = arith.constant 0 : i32
    return %c0_i32, %c0_i32_0 : i32, i32
  }
  func.func @transform_5(%arg0: i32) -> (i32, i32, i32) {
    %c0_i32 = arith.constant 0 : i32
    %c0_i32_0 = arith.constant 0 : i32
    %c0_i32_1 = arith.constant 0 : i32
    %c0_i32_2 = arith.constant 0 : i32
    return %c0_i32, %c0_i32_0, %c0_i32_1 : i32, i32, i32
  }
  func.func @transform_6(%arg0: i32) -> (i32, i32) {
    %c0_i32 = arith.constant 0 : i32
    %c0_i32_0 = arith.constant 0 : i32
    %c0_i32_1 = arith.constant 0 : i32
    return %c0_i32, %c0_i32_0 : i32, i32
  }
  func.func @transform_7(%arg0: i32) -> (i32, i32) {
    %c0_i32 = arith.constant 0 : i32
    %c0_i32_0 = arith.constant 0 : i32
    %c0_i32_1 = arith.constant 0 : i32
    return %c0_i32, %c0_i32_0 : i32, i32
  }
  func.func @transform_8(%arg0: i32) -> (i32, i32) {
    %c0_i32 = arith.constant 0 : i32
    %c0_i32_0 = arith.constant 0 : i32
    %c0_i32_1 = arith.constant 0 : i32
    return %c0_i32, %c0_i32_0 : i32, i32
  }
  func.func @transform_9(%arg0: i32) -> (i32, i32, i32) {
    %c0_i32 = arith.constant 0 : i32
    %c0_i32_0 = arith.constant 0 : i32
    %c0_i32_1 = arith.constant 0 : i32
    return %arg0, %c0_i32, %c0_i32_0 : i32, i32, i32
  }
}

</mosaic_0001>

<llo_original>
// kernel: tpu_custom_call.1
$region0: #{tpu_custom_call.1}
  #allocation0 [shape = 'u32[]', space=smem, size = 0x4, offset = 0x4, fixed_abs, tag = 'smem constant byte address 0x4 - core index']
  #allocation1 [shape = 'u32[144,128]{1,0:T(1,128)}', space=vmem, size = 0x12000, scoped, tag = 'internal scratch']
  %s0 = inlined_call_operand.vmem [shape: f32[2,4,16], index: 0, kind: input, shape index: {}]
  %s1 = inlined_call_operand.vmem [shape: f32[2,32,4], index: 1, kind: input, shape index: {}]
  %s2 = inlined_call_operand.vmem [shape: f32[32,1], index: 2, kind: input, shape index: {}]
  %s3 = inlined_call_operand.vmem [shape: f32[32,32], index: 3, kind: input, shape index: {}]
  %s4 = inlined_call_operand.vmem [shape: f32[32,1], index: 4, kind: input, shape index: {}]
  %s5 = inlined_call_operand.vmem [shape: f32[2,32,32], index: 5, kind: input, shape index: {}]
  %s6 = inlined_call_operand.vmem [shape: f32[32,1], index: 6, kind: input, shape index: {}]
  %s7 = inlined_call_operand.vmem [shape: f32[32,32], index: 7, kind: input, shape index: {}]
  %s8 = inlined_call_operand.vmem [shape: f32[32,1], index: 8, kind: input, shape index: {}]
  %s9 = inlined_call_operand.vmem [shape: f32[2,32,14], index: 9, kind: output, shape index: {}]
  %s10 = sld [smem:[#allocation0]]
  $region69: #{tpu_custom_call.1} parent=0
    _
  %s12 = ssub.s32 1, %s10
  %s13 = scalar_select 0, %s12, %s10
  loop: start=0, step=1, limit=4
  $region2: #{tpu_custom_call.1} parent=0 // loop_pre_header
    _
  $region3: #{tpu_custom_call.1} parent=0 // loop_header
    %s15 = sphi 0, %s19
    %p16 = scmp.ge.s32.totalorder %s15, 4
    %s25 = sphi 0, %s27
    %s28 = sphi 0, %s25
    %s29 = sphi 0, %s28
    %s45 = sphi 0, %s29
    %s49 = sphi 0, %s49
    %s51 = sphi 0, %s49
    %s52 = sphi 0, %s51
    %s66 = sphi 0, %s52
    %s70 = sphi 0, %s70
    %s72 = sphi 0, %s70
    %s73 = sphi 0, %s72
    %s87 = sphi 0, %s73
    %s91 = sphi 0, %s91
    %s93 = sphi 0, %s91
    %s94 = sphi 0, %s93
    %s108 = sphi 0, %s94
    %s112 = sphi 0, %s112
    %s114 = sphi 0, %s112
    %s115 = sphi 0, %s114
    %s129 = sphi 0, %s115
    %s133 = sphi 0, %s133
    %s135 = sphi 0, %s133
    %s136 = sphi 0, %s135
    %s150 = sphi 0, %s136
    %s154 = sphi 0, %s154
    %s156 = sphi 0, %s154
    %s157 = sphi 0, %s156
    %s171 = sphi 0, %s157
    %s175 = sphi 0, %s175
    %s177 = sphi 0, %s175
    %s178 = sphi 0, %s177
    %s192 = sphi 0, %s178
    %s196 = sphi 0, %s196
    %s198 = sphi 0, %s196
    %s199 = sphi 0, %s198
    %s213 = sphi 0, %s199
    %s219 = sphi 0, %s221
    %s222 = sphi 0, %s219
    %s223 = sphi 0, %s222
    %s239 = sphi 0, %s223
  $region4: #{tpu_custom_call.1} parent=0 // loop_header_branch
    %18 = sbr.rel (%p16) target = $region8
  $region5: #{tpu_custom_call.1} parent=0 // loop_body
    %s20 = ssub.s32 %s15, 1
    %s21 = ssub.s32 %s15, 2
    %s22 = sadd.s32 %s15, 1
    %s23 = ssub.s32 %s15, %s22
    %p24 = scmp.eq.s32.totalorder %s23, 0
    %s26 = sadd.s32 %s25, 1
    %s27 = scalar_select %p24, %s25, %s26
    %p30 = pneg %p24
    %p31 = scmp.eq.s32.totalorder %s15, 1
    %p32 = por %p30, %p31
    %p33 = scmp.ne.s32.totalorder %s25, %s28
    %p34 = scmp.eq.s32.totalorder %s15, 0
    %p35 = por %p33, %p34
    %p36 = scmp.ne.s32.totalorder %s25, %s28
    %p37 = scmp.eq.s32.totalorder %s20, 1
    %p38 = por %p36, %p37
    %p39 = scmp.ne.s32.totalorder %s28, %s29
    %p40 = scmp.eq.s32.totalorder %s20, 0
    %p41 = por %p39, %p40
    %p42 = scmp.ne.s32.totalorder %s28, %s29
    %p43 = scmp.eq.s32.totalorder %s21, 1
    %p44 = por %p42, %p43
    %p46 = scmp.ne.s32.totalorder %s29, %s45
    %p47 = scmp.eq.s32.totalorder %s21, 0
    %p48 = por %p46, %p47
    %s50 = sadd.s32 %s49, 1
    %p53 = scmp.eq.s32.totalorder %s15, 1
    %p54 = scmp.ne.s32.totalorder %s49, %s51
    %p55 = scmp.eq.s32.totalorder %s15, 0
    %p56 = por %p54, %p55
    %p57 = scmp.ne.s32.totalorder %s49, %s51
    %p58 = scmp.eq.s32.totalorder %s20, 1
    %p59 = por %p57, %p58
    %p60 = scmp.ne.s32.totalorder %s51, %s52
    %p61 = scmp.eq.s32.totalorder %s20, 0
    %p62 = por %p60, %p61
    %p63 = scmp.ne.s32.totalorder %s51, %s52
    %p64 = scmp.eq.s32.totalorder %s21, 1
    %p65 = por %p63, %p64
    %p67 = scmp.ne.s32.totalorder %s52, %s66
    %p68 = scmp.eq.s32.totalorder %s21, 0
    %p69 = por %p67, %p68
    %s71 = sadd.s32 %s70, 1
    %p74 = scmp.eq.s32.totalorder %s15, 1
    %p75 = scmp.ne.s32.totalorder %s70, %s72
    %p76 = scmp.eq.s32.totalorder %s15, 0
    %p77 = por %p75, %p76
    %p78 = scmp.ne.s32.totalorder %s70, %s72
    %p79 = scmp.eq.s32.totalorder %s20, 1
    %p80 = por %p78, %p79
    %p81 = scmp.ne.s32.totalorder %s72, %s73
    %p82 = scmp.eq.s32.totalorder %s20, 0
    %p83 = por %p81, %p82
    %p84 = scmp.ne.s32.totalorder %s72, %s73
    %p85 = scmp.eq.s32.totalorder %s21, 1
    %p86 = por %p84, %p85
    %p88 = scmp.ne.s32.totalorder %s73, %s87
    %p89 = scmp.eq.s32.totalorder %s21, 0
    %p90 = por %p88, %p89
    %s92 = sadd.s32 %s91, 1
    %p95 = scmp.eq.s32.totalorder %s15, 1
    %p96 = scmp.ne.s32.totalorder %s91, %s93
    %p97 = scmp.eq.s32.totalorder %s15, 0
    %p98 = por %p96, %p97
    %p99 = scmp.ne.s32.totalorder %s91, %s93
    %p100 = scmp.eq.s32.totalorder %s20, 1
    %p101 = por %p99, %p100
    %p102 = scmp.ne.s32.totalorder %s93, %s94
    %p103 = scmp.eq.s32.totalorder %s20, 0
    %p104 = por %p102, %p103
    %p105 = scmp.ne.s32.totalorder %s93, %s94
    %p106 = scmp.eq.s32.totalorder %s21, 1
    %p107 = por %p105, %p106
    %p109 = scmp.ne.s32.totalorder %s94, %s108
    %p110 = scmp.eq.s32.totalorder %s21, 0
    %p111 = por %p109, %p110
    %s113 = sadd.s32 %s112, 1
    %p116 = scmp.eq.s32.totalorder %s15, 1
    %p117 = scmp.ne.s32.totalorder %s112, %s114
    %p118 = scmp.eq.s32.totalorder %s15, 0
    %p119 = por %p117, %p118
    %p120 = scmp.ne.s32.totalorder %s112, %s114
    %p121 = scmp.eq.s32.totalorder %s20, 1
    %p122 = por %p120, %p121
    %p123 = scmp.ne.s32.totalorder %s114, %s115
    %p124 = scmp.eq.s32.totalorder %s20, 0
    %p125 = por %p123, %p124
    %p126 = scmp.ne.s32.totalorder %s114, %s115
    %p127 = scmp.eq.s32.totalorder %s21, 1
    %p128 = por %p126, %p127
    %p130 = scmp.ne.s32.totalorder %s115, %s129
    %p131 = scmp.eq.s32.totalorder %s21, 0
    %p132 = por %p130, %p131
    %s134 = sadd.s32 %s133, 1
    %p137 = scmp.eq.s32.totalorder %s15, 1
    %p138 = scmp.ne.s32.totalorder %s133, %s135
    %p139 = scmp.eq.s32.totalorder %s15, 0
    %p140 = por %p138, %p139
    %p141 = scmp.ne.s32.totalorder %s133, %s135
    %p142 = scmp.eq.s32.totalorder %s20, 1
    %p143 = por %p141, %p142
    %p144 = scmp.ne.s32.totalorder %s135, %s136
    %p145 = scmp.eq.s32.totalorder %s20, 0
    %p146 = por %p144, %p145
    %p147 = scmp.ne.s32.totalorder %s135, %s136
    %p148 = scmp.eq.s32.totalorder %s21, 1
    %p149 = por %p147, %p148
    %p151 = scmp.ne.s32.totalorder %s136, %s150
    %p152 = scmp.eq.s32.totalorder %s21, 0
    %p153 = por %p151, %p152
    %s155 = sadd.s32 %s154, 1
    %p158 = scmp.eq.s32.totalorder %s15, 1
    %p159 = scmp.ne.s32.totalorder %s154, %s156
    %p160 = scmp.eq.s32.totalorder %s15, 0
    %p161 = por %p159, %p160
    %p162 = scmp.ne.s32.totalorder %s154, %s156
    %p163 = scmp.eq.s32.totalorder %s20, 1
    %p164 = por %p162, %p163
    %p165 = scmp.ne.s32.totalorder %s156, %s157
    %p166 = scmp.eq.s32.totalorder %s20, 0
    %p167 = por %p165, %p166
    %p168 = scmp.ne.s32.totalorder %s156, %s157
    %p169 = scmp.eq.s32.totalorder %s21, 1
    %p170 = por %p168, %p169
    %p172 = scmp.ne.s32.totalorder %s157, %s171
    %p173 = scmp.eq.s32.totalorder %s21, 0
    %p174 = por %p172, %p173
    %s176 = sadd.s32 %s175, 1
    %p179 = scmp.eq.s32.totalorder %s15, 1
    %p180 = scmp.ne.s32.totalorder %s175, %s177
    %p181 = scmp.eq.s32.totalorder %s15, 0
    %p182 = por %p180, %p181
    %p183 = scmp.ne.s32.totalorder %s175, %s177
    %p184 = scmp.eq.s32.totalorder %s20, 1
    %p185 = por %p183, %p184
    %p186 = scmp.ne.s32.totalorder %s177, %s178
    %p187 = scmp.eq.s32.totalorder %s20, 0
    %p188 = por %p186, %p187
    %p189 = scmp.ne.s32.totalorder %s177, %s178
    %p190 = scmp.eq.s32.totalorder %s21, 1
    %p191 = por %p189, %p190
    %p193 = scmp.ne.s32.totalorder %s178, %s192
    %p194 = scmp.eq.s32.totalorder %s21, 0
    %p195 = por %p193, %p194
    %s197 = sadd.s32 %s196, 1
    %p200 = scmp.eq.s32.totalorder %s15, 1
    %p201 = scmp.ne.s32.totalorder %s196, %s198
    %p202 = scmp.eq.s32.totalorder %s15, 0
    %p203 = por %p201, %p202
    %p204 = scmp.ne.s32.totalorder %s196, %s198
    %p205 = scmp.eq.s32.totalorder %s20, 1
    %p206 = por %p204, %p205
    %p207 = scmp.ne.s32.totalorder %s198, %s199
    %p208 = scmp.eq.s32.totalorder %s20, 0
    %p209 = por %p207, %p208
    %p210 = scmp.ne.s32.totalorder %s198, %s199
    %p211 = scmp.eq.s32.totalorder %s21, 1
    %p212 = por %p210, %p211
    %p214 = scmp.ne.s32.totalorder %s199, %s213
    %p215 = scmp.eq.s32.totalorder %s21, 0
    %p216 = por %p214, %p215
    %s217 = ssub.s32 %s15, %s22
    %p218 = scmp.eq.s32.totalorder %s217, 0
    %s220 = sadd.s32 %s219, 1
    %s221 = scalar_select %p218, %s219, %s220
    %p224 = pneg %p218
    %p225 = scmp.eq.s32.totalorder %s15, 1
    %p226 = por %p224, %p225
    %p227 = scmp.ne.s32.totalorder %s219, %s222
    %p228 = scmp.eq.s32.totalorder %s15, 0
    %p229 = por %p227, %p228
    %p230 = scmp.ne.s32.totalorder %s219, %s222
    %p231 = scmp.eq.s32.totalorder %s20, 1
    %p232 = por %p230, %p231
    %p233 = scmp.ne.s32.totalorder %s222, %s223
    %p234 = scmp.eq.s32.totalorder %s20, 0
    %p235 = por %p233, %p234
    %p236 = scmp.ne.s32.totalorder %s222, %s223
    %p237 = scmp.eq.s32.totalorder %s21, 1
    %p238 = por %p236, %p237
    %p240 = scmp.ne.s32.totalorder %s223, %s239
    %p241 = scmp.eq.s32.totalorder %s21, 0
    %p242 = por %p240, %p241
    %p243 = scmp.le.s32.totalorder 1, %s15
    %p244 = scmp.lt.s32.totalorder %s15, 3
    %p245 = pnand %p243, %p244
    %p246 = pneg %p245
    // Predicated region
    $region9: #{tpu_custom_call.1} parent=5 // pred_check
      _
    $region10: #{tpu_custom_call.1} parent=5 // pred_check_branch
      %248 = sbr.rel (%p245) target = $region12
    $region11: #{tpu_custom_call.1} parent=5 // pred_region
      %s249 = ssub.s32 %s15, 1
      // Predicated region
      $region13: #{tpu_custom_call.1} parent=11 // pred_check
        %p250 = pneg %p62
      $region14: #{tpu_custom_call.1} parent=11 // pred_check_branch
        %252 = sbr.rel (%p250) target = $region16
      $region15: #{tpu_custom_call.1} parent=11 // pred_region
        _
      $region16: #{tpu_custom_call.1} parent=11 // pred_fallthru
        _
      // Predicated region
      $region17: #{tpu_custom_call.1} parent=11 // pred_check
        %p253 = pneg %p83
      $region18: #{tpu_custom_call.1} parent=11 // pred_check_branch
        %255 = sbr.rel (%p253) target = $region20
      $region19: #{tpu_custom_call.1} parent=11 // pred_region
        _
      $region20: #{tpu_custom_call.1} parent=11 // pred_fallthru
        _
      // Predicated region
      $region21: #{tpu_custom_call.1} parent=11 // pred_check
        %p256 = pneg %p104
      $region22: #{tpu_custom_call.1} parent=11 // pred_check_branch
        %258 = sbr.rel (%p256) target = $region24
      $region23: #{tpu_custom_call.1} parent=11 // pred_region
        _
      $region24: #{tpu_custom_call.1} parent=11 // pred_fallthru
        _
      // Predicated region
      $region25: #{tpu_custom_call.1} parent=11 // pred_check
        %p259 = pneg %p125
      $region26: #{tpu_custom_call.1} parent=11 // pred_check_branch
        %261 = sbr.rel (%p259) target = $region28
      $region27: #{tpu_custom_call.1} parent=11 // pred_region
        _
      $region28: #{tpu_custom_call.1} parent=11 // pred_fallthru
        _
      // Predicated region
      $region29: #{tpu_custom_call.1} parent=11 // pred_check
        %p262 = pneg %p146
      $region30: #{tpu_custom_call.1} parent=11 // pred_check_branch
        %264 = sbr.rel (%p262) target = $region32
      $region31: #{tpu_custom_call.1} parent=11 // pred_region
        _
      $region32: #{tpu_custom_call.1} parent=11 // pred_fallthru
        _
      // Predicated region
      $region33: #{tpu_custom_call.1} parent=11 // pred_check
        %p265 = pneg %p167
      $region34: #{tpu_custom_call.1} parent=11 // pred_check_branch
        %267 = sbr.rel (%p265) target = $region36
      $region35: #{tpu_custom_call.1} parent=11 // pred_region
        _
      $region36: #{tpu_custom_call.1} parent=11 // pred_fallthru
        _
      // Predicated region
      $region37: #{tpu_custom_call.1} parent=11 // pred_check
        %p268 = pneg %p188
      $region38: #{tpu_custom_call.1} parent=11 // pred_check_branch
        %270 = sbr.rel (%p268) target = $region40
      $region39: #{tpu_custom_call.1} parent=11 // pred_region
        _
      $region40: #{tpu_custom_call.1} parent=11 // pred_fallthru
        _
      // Predicated region
      $region41: #{tpu_custom_call.1} parent=11 // pred_check
        %p271 = pneg %p209
      $region42: #{tpu_custom_call.1} parent=11 // pred_check_branch
        %273 = sbr.rel (%p271) target = $region44
      $region43: #{tpu_custom_call.1} parent=11 // pred_region
        _
      $region44: #{tpu_custom_call.1} parent=11 // pred_fallthru
        _
    $region12: #{tpu_custom_call.1} parent=5 // pred_fallthru
      _
    %p274 = scmp.lt.s32.totalorder %s15, 2
    // Predicated region
    $region45: #{tpu_custom_call.1} parent=5 // pred_check
      %p275 = pneg %p274
    $region46: #{tpu_custom_call.1} parent=5 // pred_check_branch
      %277 = sbr.rel (%p275) target = $region48
    $region47: #{tpu_custom_call.1} parent=5 // pred_region
      // Predicated region
      $region49: #{tpu_custom_call.1} parent=47 // pred_check
        %p278 = pneg %p35
      $region50: #{tpu_custom_call.1} parent=47 // pred_check_branch
        %280 = sbr.rel (%p278) target = $region52
      $region51: #{tpu_custom_call.1} parent=47 // pred_region
        %p281 = scmp.lt.s32.totalorder %s15, 1
        %s282 = scalar_select %p281, %s15, 1
        %s283 = smul.addr %s282, 4
        %s284 = scalar_lea.vmem %s0, %s283
      $region52: #{tpu_custom_call.1} parent=47 // pred_fallthru
        _
    $region48: #{tpu_custom_call.1} parent=5 // pred_fallthru
      _
    %p285 = scmp.le.s32.totalorder 1, %s15
    %p286 = scmp.lt.s32.totalorder %s15, 3
    %p287 = pnand %p285, %p286
    %p288 = pneg %p287
    // Predicated region
    $region53: #{tpu_custom_call.1} parent=5 // pred_check
      _
    $region54: #{tpu_custom_call.1} parent=5 // pred_check_branch
      %290 = sbr.rel (%p287) target = $region56
    $region55: #{tpu_custom_call.1} parent=5 // pred_region
      %s291 = ssub.s32 %s15, 1
      %p292 = scmp.lt.s32.totalorder %s20, 1
      %s293 = scalar_select %p292, %s20, 1
      %s294 = smul.addr %s293, 4
      %s295 = scalar_lea.vmem %s0, %s294
      %p296 = pneg %p41
      %p297 = pneg %p38
      %p298 = pneg %p62
      %p299 = pneg %p59
      %p300 = pneg %p83
      %p301 = pneg %p80
      %p302 = pneg %p104
      %p303 = pneg %p101
      %p304 = pneg %p125
      %p305 = pneg %p122
      %p306 = pneg %p146
      %p307 = pneg %p143
      %p308 = pneg %p167
      %p309 = pneg %p164
      %p310 = pneg %p188
      %p311 = pneg %p185
      %p312 = pneg %p209
      %p313 = pneg %p206
      %p314 = pneg %p235
      %p315 = pneg %p232
      %p316 = scmp.lt.s32.totalorder %s20, 1
      %s317 = scalar_select %p316, %s20, 1
      %s318 = smul.addr %s317, 4
      %s319 = smul.addr %s318, 8
      %s320 = scalar_lea.vmem %s9, %s319
      %p321 = scmp.lt.s32.totalorder %s20, 1
      %s322 = scalar_select %p321, %s20, 1
      %s323 = smul.addr %s322, 4
      %s324 = scalar_lea.vmem %s0, %s323
      %p325 = scmp.lt.s32.totalorder %s20, 1
      %s326 = scalar_select %p325, %s20, 1
      %s327 = smul.addr %s326, 4
      %s328 = smul.addr %s327, 8
      %s329 = scalar_lea.vmem %s9, %s328
      %v330 = vld [vmem:[%s324] sm:$0xf]
      %v331 = vld [vmem:[%s2] sm:$0xff]
      %v332 = vld [vmem:[%s2 + $0x8] sm:$0xff]
      %v333 = vld [vmem:[%s2 + $0x10] sm:$0xff]
      %v334 = vld [vmem:[%s2 + $0x18] sm:$0xff]
      %v335 = vld [vmem:[%s3] sm:$0xff]
      %v336 = vld [vmem:[%s3 + $0x8] sm:$0xff]
      %v337 = vld [vmem:[%s3 + $0x10] sm:$0xff]
      %v338 = vld [vmem:[%s3 + $0x18] sm:$0xff]
      %v339 = vld [vmem:[%s4] sm:$0xff]
      %v340 = vld [vmem:[%s4 + $0x8] sm:$0xff]
      %v341 = vld [vmem:[%s4 + $0x10] sm:$0xff]
      %v342 = vld [vmem:[%s4 + $0x18] sm:$0xff]
      %v343 = vld [vmem:[%s1] sm:$0xff]
      %v344 = vld [vmem:[%s1 + $0x8] sm:$0xff]
      %v345 = vld [vmem:[%s1 + $0x10] sm:$0xff]
      %v346 = vld [vmem:[%s1 + $0x18] sm:$0xff]
      %348 = vrot.lane.b32.xlu0 %v330, 127
      %v349 = vpop.permute.xlu0 %348
      %vm351 = vcmask 121856
      %v352 = vsel %vm351, %v349, 0.0
      %s353 = scalar_lea.vmem %s1, 32
      %v354 = vld [vmem:[%s353] sm:$0xff]
      %v355 = vld [vmem:[%s353 + $0x8] sm:$0xff]
      %v356 = vld [vmem:[%s353 + $0x10] sm:$0xff]
      %v357 = vld [vmem:[%s353 + $0x18] sm:$0xff]
      %vm358 = vcmask 31744
      %v360 = vsel %vm358, %v354, 0
      %v363 = vsel %vm358, %v355, 0
      %v366 = vsel %vm358, %v356, 0
      %v369 = vsel %vm358, %v357, 0
      %vm371 = vcmask 1043456
      %v373 = vsel %vm371, %v352, 0
      %375 = vmatprep.subr.mxu0 0.0
      %376 = vmatpush1.msra.mxu0 0.0
      %377 = vmatprep.subr.mxu0 0.0
      %378 = vmatpush1.msra.mxu0 0.0
      %379 = vmatprep.subr.mxu0 0.0
      %380 = vmatpush1.msra.mxu0 0.0
      %381 = vmatprep.subr.mxu0 0.0
      %382 = vmatpush1.msra.mxu0 0.0
      %383 = vmatprep.subr.mxu0 0.0
      %384 = vmatpush1.msra.mxu0 0.0
      %385 = vmatprep.subr.mxu0 0.0
      %386 = vmatpush1.msra.mxu0 0.0
      %387 = vmatprep.subr.mxu0 0.0
      %388 = vmatpush1.msra.mxu0 0.0
      %389 = vmatprep.subr.mxu0 0.0
      %390 = vmatpush1.msra.mxu0 0.0
      %391 = vmatprep.subr.mxu0 0.0
      %392 = vmatpush1.msra.mxu0 0.0
      %393 = vmatprep.subr.mxu0 0.0
      %394 = vmatpush1.msra.mxu0 0.0
      %395 = vmatprep.subr.mxu0 0.0
      %396 = vmatpush1.msra.mxu0 0.0
      %397 = vmatprep.subr.mxu0 0.0
      %398 = vmatpush1.msra.mxu0 0.0
      %399 = vmatprep.subr.mxu0 0.0
      %400 = vmatpush1.msra.mxu0 0.0
      %401 = vmatprep.subr.mxu0 0.0
      %402 = vmatpush1.msra.mxu0 0.0
      %403 = vmatprep.subr.mxu0 0.0
      %404 = vmatpush1.msra.mxu0 0.0
      %405 = vmatprep.subr.mxu0 0.0
      %406 = vmatpush1.msra.mxu0 %v373
      %407 = vmatprep.subr.mxu0 0.0
      %408 = vmatpush2.msra.mxu0 0.0
      %409 = vmatprep.subr.mxu0 0.0
      %410 = vmatpush2.msra.mxu0 0.0
      %411 = vmatprep.subr.mxu0 0.0
      %412 = vmatpush2.msra.mxu0 0.0
      %413 = vmatprep.subr.mxu0 0.0
      %414 = vmatpush2.msra.mxu0 0.0
      %415 = vmatprep.subr.mxu0 0.0
      %416 = vmatpush2.msra.mxu0 0.0
      %417 = vmatprep.subr.mxu0 0.0
      %418 = vmatpush2.msra.mxu0 0.0
      %419 = vmatprep.subr.mxu0 0.0
      %420 = vmatpush2.msra.mxu0 0.0
      %421 = vmatprep.subr.mxu0 0.0
      %422 = vmatpush2.msra.mxu0 0.0
      %423 = vmatprep.subr.mxu0 0.0
      %424 = vmatpush2.msra.mxu0 0.0
      %425 = vmatprep.subr.mxu0 0.0
      %426 = vmatpush2.msra.mxu0 0.0
      %427 = vmatprep.subr.mxu0 0.0
      %428 = vmatpush2.msra.mxu0 0.0
      %429 = vmatprep.subr.mxu0 0.0
      %430 = vmatpush2.msra.mxu0 0.0
      %431 = vmatprep.subr.mxu0 0.0
      %432 = vmatpush2.msra.mxu0 0.0
      %433 = vmatprep.subr.mxu0 0.0
      %434 = vmatpush2.msra.mxu0 0.0
      %435 = vmatprep.subr.mxu0 0.0
      %436 = vmatpush2.msra.mxu0 0.0
      %437 = vmatprep.subr.mxu0 0.0
      %438 = vmatpush2.msra.mxu0 0.0
      %439 = vmatprep.mubr.f32.mxu0 0.0
      %440 = vmatmul.mubr.f32.gmra.mxu0 %v360
      %v441 = vpop.f32.mrf.mxu0
      %v442 = vadd.f32 0.0, %v441
      %v443 = vpop.f32.mrf.mxu0
      %444 = vmatprep.mubr.f32.mxu0 0.0
      %445 = vmatmul.mubr.f32.gmra.mxu0 %v363
      %v446 = vpop.f32.mrf.mxu0
      %v447 = vadd.f32 0.0, %v446
      %v448 = vpop.f32.mrf.mxu0
      %449 = vmatprep.mubr.f32.mxu0 0.0
      %450 = vmatmul.mubr.f32.gmra.mxu0 %v366
      %v451 = vpop.f32.mrf.mxu0
      %v452 = vadd.f32 0.0, %v451
      %v453 = vpop.f32.mrf.mxu0
      %454 = vmatprep.mubr.f32.mxu0 0.0
      %455 = vmatmul.mubr.f32.gmra.mxu0 %v369
      %v456 = vpop.f32.mrf.mxu0
      %v457 = vadd.f32 0.0, %v456
      %v458 = vpop.f32.mrf.mxu0
      %459 = vdwg.mxu0
      %v461 = vsel %vm358, %v343, 0
      %v464 = vsel %vm358, %v344, 0
      %v467 = vsel %vm358, %v345, 0
      %v470 = vsel %vm358, %v346, 0
      %v472 = vsel %vm371, %v330, 0
      %474 = vmatprep.subr.mxu0 0.0
      %475 = vmatpush1.msra.mxu0 0.0
      %476 = vmatprep.subr.mxu0 0.0
      %477 = vmatpush1.msra.mxu0 0.0
      %478 = vmatprep.subr.mxu0 0.0
      %479 = vmatpush1.msra.mxu0 0.0
      %480 = vmatprep.subr.mxu0 0.0
      %481 = vmatpush1.msra.mxu0 0.0
      %482 = vmatprep.subr.mxu0 0.0
      %483 = vmatpush1.msra.mxu0 0.0
      %484 = vmatprep.subr.mxu0 0.0
      %485 = vmatpush1.msra.mxu0 0.0
      %486 = vmatprep.subr.mxu0 0.0
      %487 = vmatpush1.msra.mxu0 0.0
      %488 = vmatprep.subr.mxu0 0.0
      %489 = vmatpush1.msra.mxu0 0.0
      %490 = vmatprep.subr.mxu0 0.0
      %491 = vmatpush1.msra.mxu0 0.0
      %492 = vmatprep.subr.mxu0 0.0
      %493 = vmatpush1.msra.mxu0 0.0
      %494 = vmatprep.subr.mxu0 0.0
      %495 = vmatpush1.msra.mxu0 0.0
      %496 = vmatprep.subr.mxu0 0.0
      %497 = vmatpush1.msra.mxu0 0.0
      %498 = vmatprep.subr.mxu0 0.0
      %499 = vmatpush1.msra.mxu0 0.0
      %500 = vmatprep.subr.mxu0 0.0
      %501 = vmatpush1.msra.mxu0 0.0
      %502 = vmatprep.subr.mxu0 0.0
      %503 = vmatpush1.msra.mxu0 0.0
      %504 = vmatprep.subr.mxu0 0.0
      %505 = vmatpush1.msra.mxu0 %v472
      %506 = vmatprep.subr.mxu0 0.0
      %507 = vmatpush2.msra.mxu0 0.0
      %508 = vmatprep.subr.mxu0 0.0
      %509 = vmatpush2.msra.mxu0 0.0
      %510 = vmatprep.subr.mxu0 0.0
      %511 = vmatpush2.msra.mxu0 0.0
      %512 = vmatprep.subr.mxu0 0.0
      %513 = vmatpush2.msra.mxu0 0.0
      %514 = vmatprep.subr.mxu0 0.0
      %515 = vmatpush2.msra.mxu0 0.0
      %516 = vmatprep.subr.mxu0 0.0
      %517 = vmatpush2.msra.mxu0 0.0
      %518 = vmatprep.subr.mxu0 0.0
      %519 = vmatpush2.msra.mxu0 0.0
      %520 = vmatprep.subr.mxu0 0.0
      %521 = vmatpush2.msra.mxu0 0.0
      %522 = vmatprep.subr.mxu0 0.0
      %523 = vmatpush2.msra.mxu0 0.0
      %524 = vmatprep.subr.mxu0 0.0
      %525 = vmatpush2.msra.mxu0 0.0
      %526 = vmatprep.subr.mxu0 0.0
      %527 = vmatpush2.msra.mxu0 0.0
      %528 = vmatprep.subr.mxu0 0.0
      %529 = vmatpush2.msra.mxu0 0.0
      %530 = vmatprep.subr.mxu0 0.0
      %531 = vmatpush2.msra.mxu0 0.0
      %532 = vmatprep.subr.mxu0 0.0
      %533 = vmatpush2.msra.mxu0 0.0
      %534 = vmatprep.subr.mxu0 0.0
      %535 = vmatpush2.msra.mxu0 0.0
      %536 = vmatprep.subr.mxu0 0.0
      %537 = vmatpush2.msra.mxu0 0.0
      %538 = vmatprep.mubr.f32.mxu0 0.0
      %539 = vmatmul.mubr.f32.gmra.mxu0 %v461
      %v540 = vpop.f32.mrf.mxu0
      %v541 = vadd.f32 %v442, %v540
      %v542 = vpop.f32.mrf.mxu0
      %543 = vmatprep.mubr.f32.mxu0 0.0
      %544 = vmatmul.mubr.f32.gmra.mxu0 %v464
      %v545 = vpop.f32.mrf.mxu0
      %v546 = vadd.f32 %v447, %v545
      %v547 = vpop.f32.mrf.mxu0
      %548 = vmatprep.mubr.f32.mxu0 0.0
      %549 = vmatmul.mubr.f32.gmra.mxu0 %v467
      %v550 = vpop.f32.mrf.mxu0
      %v551 = vadd.f32 %v452, %v550
      %v552 = vpop.f32.mrf.mxu0
      %553 = vmatprep.mubr.f32.mxu0 0.0
      %554 = vmatmul.mubr.f32.gmra.mxu0 %v470
      %v555 = vpop.f32.mrf.mxu0
      %v556 = vadd.f32 %v457, %v555
      %v557 = vpop.f32.mrf.mxu0
      %558 = vdwg.mxu0
      %560 = vset.pattern.permute.xlu0 0
      %561 = vperm.xlu0 %560, %v331
      %v562 = vpop.permute.xlu0 %561
      %565 = vset.pattern.permute.xlu0 0
      %566 = vperm.xlu0 %565, %v332
      %v567 = vpop.permute.xlu0 %566
      %570 = vset.pattern.permute.xlu0 0
      %571 = vperm.xlu0 %570, %v333
      %v572 = vpop.permute.xlu0 %571
      %575 = vset.pattern.permute.xlu0 0
      %576 = vperm.xlu0 %575, %v334
      %v577 = vpop.permute.xlu0 %576
      %v579 = vadd.f32 %v541, %v562
      %v580 = vadd.f32 %v546, %v567
      %v581 = vadd.f32 %v551, %v572
      %v582 = vadd.f32 %v556, %v577
      %v583 = vtanh.pop %v579
      %v584 = vtanh.pop %v580
      %v585 = vtanh.pop %v581
      %v586 = vtanh.pop %v582
      %588 = vset.pattern.permute.xlu0 0
      %589 = vperm.xlu0 %588, %v339
      %v590 = vpop.permute.xlu0 %589
      %593 = vset.pattern.permute.xlu0 0
      %594 = vperm.xlu0 %593, %v340
      %v595 = vpop.permute.xlu0 %594
      %598 = vset.pattern.permute.xlu0 0
      %599 = vperm.xlu0 %598, %v341
      %v600 = vpop.permute.xlu0 %599
      %603 = vset.pattern.permute.xlu0 0
      %604 = vperm.xlu0 %603, %v342
      %v605 = vpop.permute.xlu0 %604
      %vm607 = vcmask 261120
      %v609 = vsel %vm607, %v335, 0
      %v612 = vsel %vm607, %v336, 0
      %v615 = vsel %vm607, %v337, 0
      %v618 = vsel %vm607, %v338, 0
      %620 = vmatprep.subr.mxu0 0.0
      %621 = vmatpush1.msra.mxu0 0.0
      %622 = vmatprep.subr.mxu0 0.0
      %623 = vmatpush1.msra.mxu0 0.0
      %624 = vmatprep.subr.mxu0 0.0
      %625 = vmatpush1.msra.mxu0 0.0
      %626 = vmatprep.subr.mxu0 0.0
      %627 = vmatpush1.msra.mxu0 0.0
      %628 = vmatprep.subr.mxu0 0.0
      %629 = vmatpush1.msra.mxu0 0.0
      %630 = vmatprep.subr.mxu0 0.0
      %631 = vmatpush1.msra.mxu0 0.0
      %632 = vmatprep.subr.mxu0 0.0
      %633 = vmatpush1.msra.mxu0 0.0
      %634 = vmatprep.subr.mxu0 0.0
      %635 = vmatpush1.msra.mxu0 0.0
      %636 = vmatprep.subr.mxu0 0.0
      %637 = vmatpush1.msra.mxu0 0.0
      %638 = vmatprep.subr.mxu0 0.0
      %639 = vmatpush1.msra.mxu0 0.0
      %640 = vmatprep.subr.mxu0 0.0
      %641 = vmatpush1.msra.mxu0 0.0
      %642 = vmatprep.subr.mxu0 0.0
      %643 = vmatpush1.msra.mxu0 0.0
      %644 = vmatprep.subr.mxu0 0.0
      %645 = vmatpush1.msra.mxu0 %v586
      %646 = vmatprep.subr.mxu0 0.0
      %647 = vmatpush1.msra.mxu0 %v585
      %648 = vmatprep.subr.mxu0 0.0
      %649 = vmatpush1.msra.mxu0 %v584
      %650 = vmatprep.subr.mxu0 0.0
      %651 = vmatpush1.msra.mxu0 %v583
      %652 = vmatprep.subr.mxu0 0.0
      %653 = vmatpush2.msra.mxu0 0.0
      %654 = vmatprep.subr.mxu0 0.0
      %655 = vmatpush2.msra.mxu0 0.0
      %656 = vmatprep.subr.mxu0 0.0
      %657 = vmatpush2.msra.mxu0 0.0
      %658 = vmatprep.subr.mxu0 0.0
      %659 = vmatpush2.msra.mxu0 0.0
      %660 = vmatprep.subr.mxu0 0.0
      %661 = vmatpush2.msra.mxu0 0.0
      %662 = vmatprep.subr.mxu0 0.0
      %663 = vmatpush2.msra.mxu0 0.0
      %664 = vmatprep.subr.mxu0 0.0
      %665 = vmatpush2.msra.mxu0 0.0
      %666 = vmatprep.subr.mxu0 0.0
      %667 = vmatpush2.msra.mxu0 0.0
      %668 = vmatprep.subr.mxu0 0.0
      %669 = vmatpush2.msra.mxu0 0.0
      %670 = vmatprep.subr.mxu0 0.0
      %671 = vmatpush2.msra.mxu0 0.0
      %672 = vmatprep.subr.mxu0 0.0
      %673 = vmatpush2.msra.mxu0 0.0
      %674 = vmatprep.subr.mxu0 0.0
      %675 = vmatpush2.msra.mxu0 0.0
      %676 = vmatprep.subr.mxu0 0.0
      %677 = vmatpush2.msra.mxu0 0.0
      %678 = vmatprep.subr.mxu0 0.0
      %679 = vmatpush2.msra.mxu0 0.0
      %680 = vmatprep.subr.mxu0 0.0
      %681 = vmatpush2.msra.mxu0 0.0
      %682 = vmatprep.subr.mxu0 0.0
      %683 = vmatpush2.msra.mxu0 0.0
      %684 = vmatprep.mubr.f32.mxu0 0.0
      %685 = vmatmul.mubr.f32.gmra.mxu0 %v609
      %v686 = vpop.f32.mrf.mxu0
      %v687 = vadd.f32 %v590, %v686
      %v688 = vpop.f32.mrf.mxu0
      %689 = vmatprep.mubr.f32.mxu0 0.0
      %690 = vmatmul.mubr.f32.gmra.mxu0 %v612
      %v691 = vpop.f32.mrf.mxu0
      %v692 = vadd.f32 %v595, %v691
      %v693 = vpop.f32.mrf.mxu0
      %694 = vmatprep.mubr.f32.mxu0 0.0
      %695 = vmatmul.mubr.f32.gmra.mxu0 %v615
      %v696 = vpop.f32.mrf.mxu0
      %v697 = vadd.f32 %v600, %v696
      %v698 = vpop.f32.mrf.mxu0
      %699 = vmatprep.mubr.f32.mxu0 0.0
      %700 = vmatmul.mubr.f32.gmra.mxu0 %v618
      %v701 = vpop.f32.mrf.mxu0
      %v702 = vadd.f32 %v605, %v701
      %v703 = vpop.f32.mrf.mxu0
      %704 = vdwg.mxu0
      %v705 = vtanh.pop %v687
      %v706 = vtanh.pop %v692
      %v707 = vtanh.pop %v697
      %v708 = vtanh.pop %v702
      %v709 = vld [vmem:[%s6] sm:$0xff]
      %v710 = vld [vmem:[%s6 + $0x8] sm:$0xff]
      %v711 = vld [vmem:[%s6 + $0x10] sm:$0xff]
      %v712 = vld [vmem:[%s6 + $0x18] sm:$0xff]
      %v713 = vld [vmem:[%s7] sm:$0xff]
      %v714 = vld [vmem:[%s7 + $0x8] sm:$0xff]
      %v715 = vld [vmem:[%s7 + $0x10] sm:$0xff]
      %v716 = vld [vmem:[%s7 + $0x18] sm:$0xff]
      %v717 = vld [vmem:[%s8] sm:$0xff]
      %v718 = vld [vmem:[%s8 + $0x8] sm:$0xff]
      %v719 = vld [vmem:[%s8 + $0x10] sm:$0xff]
      %v720 = vld [vmem:[%s8 + $0x18] sm:$0xff]
      %v721 = vld [vmem:[%s5] sm:$0xff]
      %v722 = vld [vmem:[%s5 + $0x8] sm:$0xff]
      %v723 = vld [vmem:[%s5 + $0x10] sm:$0xff]
      %v724 = vld [vmem:[%s5 + $0x18] sm:$0xff]
      %729 = vrot.lane.b32.xlu0 %v705, 127
      %v730 = vpop.permute.xlu0 %729
      %731 = vrot.lane.b32.xlu0 %v706, 127
      %v732 = vpop.permute.xlu0 %731
      %733 = vrot.lane.b32.xlu0 %v707, 127
      %v734 = vpop.permute.xlu0 %733
      %735 = vrot.lane.b32.xlu0 %v708, 127
      %v736 = vpop.permute.xlu0 %735
      %v741 = vsel %vm351, %v730, 0.0
      %v742 = vsel %vm351, %v732, 0.0
      %v743 = vsel %vm351, %v734, 0.0
      %v744 = vsel %vm351, %v736, 0.0
      %s745 = scalar_lea.vmem %s5, 32
      %v746 = vld [vmem:[%s745] sm:$0xff]
      %v747 = vld [vmem:[%s745 + $0x8] sm:$0xff]
      %v748 = vld [vmem:[%s745 + $0x10] sm:$0xff]
      %v749 = vld [vmem:[%s745 + $0x18] sm:$0xff]
      %v751 = vsel %vm607, %v746, 0
      %v754 = vsel %vm607, %v747, 0
      %v757 = vsel %vm607, %v748, 0
      %v760 = vsel %vm607, %v749, 0
      %762 = vmatprep.subr.mxu0 0.0
      %763 = vmatpush1.msra.mxu0 0.0
      %764 = vmatprep.subr.mxu0 0.0
      %765 = vmatpush1.msra.mxu0 0.0
      %766 = vmatprep.subr.mxu0 0.0
      %767 = vmatpush1.msra.mxu0 0.0
      %768 = vmatprep.subr.mxu0 0.0
      %769 = vmatpush1.msra.mxu0 0.0
      %770 = vmatprep.subr.mxu0 0.0
      %771 = vmatpush1.msra.mxu0 0.0
      %772 = vmatprep.subr.mxu0 0.0
      %773 = vmatpush1.msra.mxu0 0.0
      %774 = vmatprep.subr.mxu0 0.0
      %775 = vmatpush1.msra.mxu0 0.0
      %776 = vmatprep.subr.mxu0 0.0
      %777 = vmatpush1.msra.mxu0 0.0
      %778 = vmatprep.subr.mxu0 0.0
      %779 = vmatpush1.msra.mxu0 0.0
      %780 = vmatprep.subr.mxu0 0.0
      %781 = vmatpush1.msra.mxu0 0.0
      %782 = vmatprep.subr.mxu0 0.0
      %783 = vmatpush1.msra.mxu0 0.0
      %784 = vmatprep.subr.mxu0 0.0
      %785 = vmatpush1.msra.mxu0 0.0
      %786 = vmatprep.subr.mxu0 0.0
      %787 = vmatpush1.msra.mxu0 %v744
      %788 = vmatprep.subr.mxu0 0.0
      %789 = vmatpush1.msra.mxu0 %v743
      %790 = vmatprep.subr.mxu0 0.0
      %791 = vmatpush1.msra.mxu0 %v742
      %792 = vmatprep.subr.mxu0 0.0
      %793 = vmatpush1.msra.mxu0 %v741
      %794 = vmatprep.subr.mxu0 0.0
      %795 = vmatpush2.msra.mxu0 0.0
      %796 = vmatprep.subr.mxu0 0.0
      %797 = vmatpush2.msra.mxu0 0.0
      %798 = vmatprep.subr.mxu0 0.0
      %799 = vmatpush2.msra.mxu0 0.0
      %800 = vmatprep.subr.mxu0 0.0
      %801 = vmatpush2.msra.mxu0 0.0
      %802 = vmatprep.subr.mxu0 0.0
      %803 = vmatpush2.msra.mxu0 0.0
      %804 = vmatprep.subr.mxu0 0.0
      %805 = vmatpush2.msra.mxu0 0.0
      %806 = vmatprep.subr.mxu0 0.0
      %807 = vmatpush2.msra.mxu0 0.0
      %808 = vmatprep.subr.mxu0 0.0
      %809 = vmatpush2.msra.mxu0 0.0
      %810 = vmatprep.subr.mxu0 0.0
      %811 = vmatpush2.msra.mxu0 0.0
      %812 = vmatprep.subr.mxu0 0.0
      %813 = vmatpush2.msra.mxu0 0.0
      %814 = vmatprep.subr.mxu0 0.0
      %815 = vmatpush2.msra.mxu0 0.0
      %816 = vmatprep.subr.mxu0 0.0
      %817 = vmatpush2.msra.mxu0 0.0
      %818 = vmatprep.subr.mxu0 0.0
      %819 = vmatpush2.msra.mxu0 0.0
      %820 = vmatprep.subr.mxu0 0.0
      %821 = vmatpush2.msra.mxu0 0.0
      %822 = vmatprep.subr.mxu0 0.0
      %823 = vmatpush2.msra.mxu0 0.0
      %824 = vmatprep.subr.mxu0 0.0
      %825 = vmatpush2.msra.mxu0 0.0
      %826 = vmatprep.mubr.f32.mxu0 0.0
      %827 = vmatmul.mubr.f32.gmra.mxu0 %v751
      %v828 = vpop.f32.mrf.mxu0
      %v829 = vadd.f32 0.0, %v828
      %v830 = vpop.f32.mrf.mxu0
      %831 = vmatprep.mubr.f32.mxu0 0.0
      %832 = vmatmul.mubr.f32.gmra.mxu0 %v754
      %v833 = vpop.f32.mrf.mxu0
      %v834 = vadd.f32 0.0, %v833
      %v835 = vpop.f32.mrf.mxu0
      %836 = vmatprep.mubr.f32.mxu0 0.0
      %837 = vmatmul.mubr.f32.gmra.mxu0 %v757
      %v838 = vpop.f32.mrf.mxu0
      %v839 = vadd.f32 0.0, %v838
      %v840 = vpop.f32.mrf.mxu0
      %841 = vmatprep.mubr.f32.mxu0 0.0
      %842 = vmatmul.mubr.f32.gmra.mxu0 %v760
      %v843 = vpop.f32.mrf.mxu0
      %v844 = vadd.f32 0.0, %v843
      %v845 = vpop.f32.mrf.mxu0
      %846 = vdwg.mxu0
      %v848 = vsel %vm607, %v721, 0
      %v851 = vsel %vm607, %v722, 0
      %v854 = vsel %vm607, %v723, 0
      %v857 = vsel %vm607, %v724, 0
      %859 = vmatprep.subr.mxu0 0.0
      %860 = vmatpush1.msra.mxu0 0.0
      %861 = vmatprep.subr.mxu0 0.0
      %862 = vmatpush1.msra.mxu0 0.0
      %863 = vmatprep.subr.mxu0 0.0
      %864 = vmatpush1.msra.mxu0 0.0
      %865 = vmatprep.subr.mxu0 0.0
      %866 = vmatpush1.msra.mxu0 0.0
      %867 = vmatprep.subr.mxu0 0.0
      %868 = vmatpush1.msra.mxu0 0.0
      %869 = vmatprep.subr.mxu0 0.0
      %870 = vmatpush1.msra.mxu0 0.0
      %871 = vmatprep.subr.mxu0 0.0
      %872 = vmatpush1.msra.mxu0 0.0
      %873 = vmatprep.subr.mxu0 0.0
      %874 = vmatpush1.msra.mxu0 0.0
      %875 = vmatprep.subr.mxu0 0.0
      %876 = vmatpush1.msra.mxu0 0.0
      %877 = vmatprep.subr.mxu0 0.0
      %878 = vmatpush1.msra.mxu0 0.0
      %879 = vmatprep.subr.mxu0 0.0
      %880 = vmatpush1.msra.mxu0 0.0
      %881 = vmatprep.subr.mxu0 0.0
      %882 = vmatpush1.msra.mxu0 0.0
      %883 = vmatprep.subr.mxu0 0.0
      %884 = vmatpush1.msra.mxu0 %v708
      %885 = vmatprep.subr.mxu0 0.0
      %886 = vmatpush1.msra.mxu0 %v707
      %887 = vmatprep.subr.mxu0 0.0
      %888 = vmatpush1.msra.mxu0 %v706
      %889 = vmatprep.subr.mxu0 0.0
      %890 = vmatpush1.msra.mxu0 %v705
      %891 = vmatprep.subr.mxu0 0.0
      %892 = vmatpush2.msra.mxu0 0.0
      %893 = vmatprep.subr.mxu0 0.0
      %894 = vmatpush2.msra.mxu0 0.0
      %895 = vmatprep.subr.mxu0 0.0
      %896 = vmatpush2.msra.mxu0 0.0
      %897 = vmatprep.subr.mxu0 0.0
      %898 = vmatpush2.msra.mxu0 0.0
      %899 = vmatprep.subr.mxu0 0.0
      %900 = vmatpush2.msra.mxu0 0.0
      %901 = vmatprep.subr.mxu0 0.0
      %902 = vmatpush2.msra.mxu0 0.0
      %903 = vmatprep.subr.mxu0 0.0
      %904 = vmatpush2.msra.mxu0 0.0
      %905 = vmatprep.subr.mxu0 0.0
      %906 = vmatpush2.msra.mxu0 0.0
      %907 = vmatprep.subr.mxu0 0.0
      %908 = vmatpush2.msra.mxu0 0.0
      %909 = vmatprep.subr.mxu0 0.0
      %910 = vmatpush2.msra.mxu0 0.0
      %911 = vmatprep.subr.mxu0 0.0
      %912 = vmatpush2.msra.mxu0 0.0
      %913 = vmatprep.subr.mxu0 0.0
      %914 = vmatpush2.msra.mxu0 0.0
      %915 = vmatprep.subr.mxu0 0.0
      %916 = vmatpush2.msra.mxu0 0.0
      %917 = vmatprep.subr.mxu0 0.0
      %918 = vmatpush2.msra.mxu0 0.0
      %919 = vmatprep.subr.mxu0 0.0
      %920 = vmatpush2.msra.mxu0 0.0
      %921 = vmatprep.subr.mxu0 0.0
      %922 = vmatpush2.msra.mxu0 0.0
      %923 = vmatprep.mubr.f32.mxu0 0.0
      %924 = vmatmul.mubr.f32.gmra.mxu0 %v848
      %v925 = vpop.f32.mrf.mxu0
      %v926 = vadd.f32 %v829, %v925
      %v927 = vpop.f32.mrf.mxu0
      %928 = vmatprep.mubr.f32.mxu0 0.0
      %929 = vmatmul.mubr.f32.gmra.mxu0 %v851
      %v930 = vpop.f32.mrf.mxu0
      %v931 = vadd.f32 %v834, %v930
      %v932 = vpop.f32.mrf.mxu0
      %933 = vmatprep.mubr.f32.mxu0 0.0
      %934 = vmatmul.mubr.f32.gmra.mxu0 %v854
      %v935 = vpop.f32.mrf.mxu0
      %v936 = vadd.f32 %v839, %v935
      %v937 = vpop.f32.mrf.mxu0
      %938 = vmatprep.mubr.f32.mxu0 0.0
      %939 = vmatmul.mubr.f32.gmra.mxu0 %v857
      %v940 = vpop.f32.mrf.mxu0
      %v941 = vadd.f32 %v844, %v940
      %v942 = vpop.f32.mrf.mxu0
      %943 = vdwg.mxu0
      %945 = vset.pattern.permute.xlu0 0
      %946 = vperm.xlu0 %945, %v709
      %v947 = vpop.permute.xlu0 %946
      %950 = vset.pattern.permute.xlu0 0
      %951 = vperm.xlu0 %950, %v710
      %v952 = vpop.permute.xlu0 %951
      %955 = vset.pattern.permute.xlu0 0
      %956 = vperm.xlu0 %955, %v711
      %v957 = vpop.permute.xlu0 %956
      %960 = vset.pattern.permute.xlu0 0
      %961 = vperm.xlu0 %960, %v712
      %v962 = vpop.permute.xlu0 %961
      %v964 = vadd.f32 %v926, %v947
      %v965 = vadd.f32 %v931, %v952
      %v966 = vadd.f32 %v936, %v957
      %v967 = vadd.f32 %v941, %v962
      %v968 = vtanh.pop %v964
      %v969 = vtanh.pop %v965
      %v970 = vtanh.pop %v966
      %v971 = vtanh.pop %v967
      %973 = vset.pattern.permute.xlu0 0
      %974 = vperm.xlu0 %973, %v717
      %v975 = vpop.permute.xlu0 %974
      %978 = vset.pattern.permute.xlu0 0
      %979 = vperm.xlu0 %978, %v718
      %v980 = vpop.permute.xlu0 %979
      %983 = vset.pattern.permute.xlu0 0
      %984 = vperm.xlu0 %983, %v719
      %v985 = vpop.permute.xlu0 %984
      %988 = vset.pattern.permute.xlu0 0
      %989 = vperm.xlu0 %988, %v720
      %v990 = vpop.permute.xlu0 %989
      %v993 = vsel %vm607, %v713, 0
      %v996 = vsel %vm607, %v714, 0
      %v999 = vsel %vm607, %v715, 0
      %v1002 = vsel %vm607, %v716, 0
      %1004 = vmatprep.subr.mxu0 0.0
      %1005 = vmatpush1.msra.mxu0 0.0
      %1006 = vmatprep.subr.mxu0 0.0
      %1007 = vmatpush1.msra.mxu0 0.0
      %1008 = vmatprep.subr.mxu0 0.0
      %1009 = vmatpush1.msra.mxu0 0.0
      %1010 = vmatprep.subr.mxu0 0.0
      %1011 = vmatpush1.msra.mxu0 0.0
      %1012 = vmatprep.subr.mxu0 0.0
      %1013 = vmatpush1.msra.mxu0 0.0
      %1014 = vmatprep.subr.mxu0 0.0
      %1015 = vmatpush1.msra.mxu0 0.0
      %1016 = vmatprep.subr.mxu0 0.0
      %1017 = vmatpush1.msra.mxu0 0.0
      %1018 = vmatprep.subr.mxu0 0.0
      %1019 = vmatpush1.msra.mxu0 0.0
      %1020 = vmatprep.subr.mxu0 0.0
      %1021 = vmatpush1.msra.mxu0 0.0
      %1022 = vmatprep.subr.mxu0 0.0
      %1023 = vmatpush1.msra.mxu0 0.0
      %1024 = vmatprep.subr.mxu0 0.0
      %1025 = vmatpush1.msra.mxu0 0.0
      %1026 = vmatprep.subr.mxu0 0.0
      %1027 = vmatpush1.msra.mxu0 0.0
      %1028 = vmatprep.subr.mxu0 0.0
      %1029 = vmatpush1.msra.mxu0 %v971
      %1030 = vmatprep.subr.mxu0 0.0
      %1031 = vmatpush1.msra.mxu0 %v970
      %1032 = vmatprep.subr.mxu0 0.0
      %1033 = vmatpush1.msra.mxu0 %v969
      %1034 = vmatprep.subr.mxu0 0.0
      %1035 = vmatpush1.msra.mxu0 %v968
      %1036 = vmatprep.subr.mxu0 0.0
      %1037 = vmatpush2.msra.mxu0 0.0
      %1038 = vmatprep.subr.mxu0 0.0
      %1039 = vmatpush2.msra.mxu0 0.0
      %1040 = vmatprep.subr.mxu0 0.0
      %1041 = vmatpush2.msra.mxu0 0.0
      %1042 = vmatprep.subr.mxu0 0.0
      %1043 = vmatpush2.msra.mxu0 0.0
      %1044 = vmatprep.subr.mxu0 0.0
      %1045 = vmatpush2.msra.mxu0 0.0
      %1046 = vmatprep.subr.mxu0 0.0
      %1047 = vmatpush2.msra.mxu0 0.0
      %1048 = vmatprep.subr.mxu0 0.0
      %1049 = vmatpush2.msra.mxu0 0.0
      %1050 = vmatprep.subr.mxu0 0.0
      %1051 = vmatpush2.msra.mxu0 0.0
      %1052 = vmatprep.subr.mxu0 0.0
      %1053 = vmatpush2.msra.mxu0 0.0
      %1054 = vmatprep.subr.mxu0 0.0
      %1055 = vmatpush2.msra.mxu0 0.0
      %1056 = vmatprep.subr.mxu0 0.0
      %1057 = vmatpush2.msra.mxu0 0.0
      %1058 = vmatprep.subr.mxu0 0.0
      %1059 = vmatpush2.msra.mxu0 0.0
      %1060 = vmatprep.subr.mxu0 0.0
      %1061 = vmatpush2.msra.mxu0 0.0
      %1062 = vmatprep.subr.mxu0 0.0
      %1063 = vmatpush2.msra.mxu0 0.0
      %1064 = vmatprep.subr.mxu0 0.0
      %1065 = vmatpush2.msra.mxu0 0.0
      %1066 = vmatprep.subr.mxu0 0.0
      %1067 = vmatpush2.msra.mxu0 0.0
      %1068 = vmatprep.mubr.f32.mxu0 0.0
      %1069 = vmatmul.mubr.f32.gmra.mxu0 %v993
      %v1070 = vpop.f32.mrf.mxu0
      %v1071 = vadd.f32 %v975, %v1070
      %v1072 = vpop.f32.mrf.mxu0
      %1073 = vmatprep.mubr.f32.mxu0 0.0
      %1074 = vmatmul.mubr.f32.gmra.mxu0 %v996
      %v1075 = vpop.f32.mrf.mxu0
      %v1076 = vadd.f32 %v980, %v1075
      %v1077 = vpop.f32.mrf.mxu0
      %1078 = vmatprep.mubr.f32.mxu0 0.0
      %1079 = vmatmul.mubr.f32.gmra.mxu0 %v999
      %v1080 = vpop.f32.mrf.mxu0
      %v1081 = vadd.f32 %v985, %v1080
      %v1082 = vpop.f32.mrf.mxu0
      %1083 = vmatprep.mubr.f32.mxu0 0.0
      %1084 = vmatmul.mubr.f32.gmra.mxu0 %v1002
      %v1085 = vpop.f32.mrf.mxu0
      %v1086 = vadd.f32 %v990, %v1085
      %v1087 = vpop.f32.mrf.mxu0
      %1088 = vdwg.mxu0
      %v1089 = vtanh.pop %v1071
      %v1090 = vtanh.pop %v1076
      %v1091 = vtanh.pop %v1081
      %v1092 = vtanh.pop %v1086
      %vm1093 = vcmask 113664
      %1094 = vst.msk [vmem:[%s329] sm:$0xff] %vm1093, %v1089
      %1095 = vst.msk [vmem:[%s329 + $0x8] sm:$0xff] %vm1093, %v1090
      %1096 = vst.msk [vmem:[%s329 + $0x10] sm:$0xff] %vm1093, %v1091
      %1097 = vst.msk [vmem:[%s329 + $0x18] sm:$0xff] %vm1093, %v1092
      %p1098 = scmp.lt.s32.totalorder %s20, 1
      %s1099 = scalar_select %p1098, %s20, 1
      %s1100 = smul.addr %s1099, 4
      %s1101 = smul.addr %s1100, 8
      %s1102 = scalar_lea.vmem %s9, %s1101
      // Predicated region
      $region57: #{tpu_custom_call.1} parent=55 // pred_check
        %p1103 = pneg %p232
      $region58: #{tpu_custom_call.1} parent=55 // pred_check_branch
        %1105 = sbr.rel (%p1103) target = $region60
      $region59: #{tpu_custom_call.1} parent=55 // pred_region
        _
      $region60: #{tpu_custom_call.1} parent=55 // pred_fallthru
        _
    $region56: #{tpu_custom_call.1} parent=5 // pred_fallthru
      _
    %p1106 = scmp.le.s32.totalorder 2, %s15
    // Predicated region
    $region61: #{tpu_custom_call.1} parent=5 // pred_check
      %p1107 = pneg %p1106
    $region62: #{tpu_custom_call.1} parent=5 // pred_check_branch
      %1109 = sbr.rel (%p1107) target = $region64
    $region63: #{tpu_custom_call.1} parent=5 // pred_region
      %s1110 = ssub.s32 %s15, 2
      // Predicated region
      $region65: #{tpu_custom_call.1} parent=63 // pred_check
        %p1111 = pneg %p238
      $region66: #{tpu_custom_call.1} parent=63 // pred_check_branch
        %1113 = sbr.rel (%p1111) target = $region68
      $region67: #{tpu_custom_call.1} parent=63 // pred_region
        %p1114 = scmp.lt.s32.totalorder %s21, 1
        %s1115 = scalar_select %p1114, %s21, 1
        %s1116 = smul.addr %s1115, 4
        %s1117 = smul.addr %s1116, 8
        %s1118 = scalar_lea.vmem %s9, %s1117
      $region68: #{tpu_custom_call.1} parent=63 // pred_fallthru
        _
    $region64: #{tpu_custom_call.1} parent=5 // pred_fallthru
      _
  $region6: #{tpu_custom_call.1} parent=0 // loop_footer
    %s19 = sadd.s32 1, %s15
  $region7: #{tpu_custom_call.1} parent=0 // loop_footer_branch
    %14 = sbr.rel target = $region3
  $region8: #{tpu_custom_call.1} parent=0 // loop_exit
    _

</llo_original>
